<compile_context>
chip_gen: v7x
topology: tpu7x:2x2x1
jax: 0.10.0
libtpu: 0.0.40
codegen_flags: <defaults>
</compile_context>

<pallas_src>
import functools

import jax
import jax.numpy as jnp
from jax.experimental import pallas as pl
from jax.experimental.pallas import tpu as pltpu


def _round_up(a: int, m: int) -> int:
    return -(-a // m) * m


def _gumbel_softmax_kernel(x_ref, w_ref, b_ref, u_ref,
                           logits_ref, prob_ref, y_ref, *, inv_temperature):
    # ---- Linear: logits = x @ W + b  (MXU, f32 accumulation) ----
    logits = jnp.dot(x_ref[...], w_ref[...],
                     preferred_element_type=jnp.float32) + b_ref[...]
    logits_ref[...] = logits

    # ---- prob = softmax(logits, axis=-1) ----
    m = jnp.max(logits, axis=-1, keepdims=True)
    e = jnp.exp(logits - m)
    inv = 1.0 / jnp.sum(e, axis=-1, keepdims=True)   # one recip per row
    prob_ref[...] = e * inv

    # ---- Gumbel noise from streamed uniform: g = -log(-log(U+eps)+eps) ----
    eps = jnp.float32(1e-20)
    g = -jnp.log(-jnp.log(u_ref[...] + eps) + eps)

    # ---- y = softmax((logits + g) / T, axis=-1) ----
    z = (logits + g) * jnp.float32(inv_temperature)
    m2 = jnp.max(z, axis=-1, keepdims=True)
    e2 = jnp.exp(z - m2)
    inv2 = 1.0 / jnp.sum(e2, axis=-1, keepdims=True)
    y_ref[...] = e2 * inv2


def gumbel_softmax_forward(x, w, b, key, temperature=1.0, hard=False,
                           *, block_rows=2048, use_bf16_matmul=False):
    """x: [..., f_dim]; w: [f_dim, c_dim]; b: [c_dim]; key: jax PRNG key."""
    f_dim, c_dim = w.shape
    xf = x.reshape(-1, f_dim)
    n = xf.shape[0]

    # Row tile: multiple of 8 (sublane), capped by the (padded) row count.
    tn = min(_round_up(block_rows, 8), _round_up(n, 8))
    n_pad = _round_up(n, tn)
    if n_pad != n:
        xf = jnp.pad(xf, ((0, n_pad - n), (0, 0)))

    if use_bf16_matmul:
        xf = xf.astype(jnp.bfloat16)
        w_in = w.astype(jnp.bfloat16)
    else:
        xf = xf.astype(jnp.float32)
        w_in = w.astype(jnp.float32)
    b_in = b.reshape(1, c_dim).astype(jnp.float32)

    # torch.rand equivalent; per-row noise streamed into the kernel (the TPU
    # stateful PRNG has no interpret/CPU lowering, and this also avoids any
    # per-tile reseeding hazards).
    u = jax.random.uniform(key, (n_pad, c_dim), jnp.float32)

    grid = (n_pad // tn,)
    kernel = functools.partial(_gumbel_softmax_kernel,
                               inv_temperature=1.0 / float(temperature))
    out_shape = tuple(jax.ShapeDtypeStruct((n_pad, c_dim), jnp.float32)
                      for _ in range(3))

    logits, prob, y = pl.pallas_call(
        kernel,
        grid=grid,
        in_specs=[
            pl.BlockSpec((tn, f_dim), lambda i: (i, 0)),     # x tile (pipelined)
            pl.BlockSpec((f_dim, c_dim), lambda i: (0, 0)),  # W (resident)
            pl.BlockSpec((1, c_dim), lambda i: (0, 0)),      # bias (resident)
            pl.BlockSpec((tn, c_dim), lambda i: (i, 0)),     # uniform noise tile
        ],
        out_specs=(
            pl.BlockSpec((tn, c_dim), lambda i: (i, 0)),     # logits
            pl.BlockSpec((tn, c_dim), lambda i: (i, 0)),     # prob
            pl.BlockSpec((tn, c_dim), lambda i: (i, 0)),     # y
        ),
        out_shape=out_shape,
        compiler_params=pltpu.CompilerParams(
            dimension_semantics=("parallel",),               # 2x on v7x megacore
        ),
    )(xf, w_in, b_in, u)

    if n_pad != n:
        logits, prob, y = logits[:n], prob[:n], y[:n]

    if hard:
        # Straight-through one-hot (plain-JAX glue): forward value = y_hard,
        # gradient follows y — a gradient trick, not a kernel op.
        ind = jnp.argmax(y, axis=-1)
        y_hard = jax.nn.one_hot(ind, c_dim, dtype=y.dtype)
        y = jax.lax.stop_gradient(y_hard - y) + y

    return logits, prob, y


if __name__ == "__main__":
    f_dim, c_dim = 32, 8
    key = jax.random.PRNGKey(0)
    kx, kw, kb, kn = jax.random.split(key, 4)

    # deterministic "nn.Linear(f_dim, c_dim)" init: U(-1/sqrt(f_dim), 1/sqrt(f_dim))
    bound = 1.0 / (f_dim ** 0.5)
    w = jax.random.uniform(kw, (f_dim, c_dim), jnp.float32, -bound, bound)
    b = jax.random.uniform(kb, (c_dim,), jnp.float32, -bound, bound)

    # input with leading dims [2, 8] -> flattened to [16, f_dim] inside wrapper
    x = jax.random.normal(kx, (2, 8, f_dim), jnp.float32)

    logits, prob, y = gumbel_softmax_forward(x, w, b, kn,
                                             temperature=1.0, hard=False)
    jax.block_until_ready((logits, prob, y))

    # ---- reference check (pure JAX, same uniform noise key) ----
    xf = x.reshape(-1, f_dim)
    ref_logits = jnp.dot(xf, w, precision=jax.lax.Precision.HIGHEST) + b
    ref_prob = jax.nn.softmax(ref_logits, axis=-1)
    u_ref = jax.random.uniform(kn, (xf.shape[0], c_dim), jnp.float32)
    eps = 1e-20
    g_ref = -jnp.log(-jnp.log(u_ref + eps) + eps)
    ref_y = jax.nn.softmax((ref_logits + g_ref) / 1.0, axis=-1)

    assert logits.shape == (16, c_dim)
    assert prob.shape == (16, c_dim)
    assert y.shape == (16, c_dim)
    assert jnp.allclose(logits, ref_logits, atol=1e-4, rtol=1e-4), "logits mismatch"
    assert jnp.allclose(prob, ref_prob, atol=1e-4, rtol=1e-4), "prob mismatch"
    assert jnp.allclose(y, ref_y, atol=1e-3, rtol=1e-3), "y mismatch"
    assert jnp.allclose(jnp.sum(prob, axis=-1), 1.0, atol=1e-5)
    assert jnp.allclose(jnp.sum(y, axis=-1), 1.0, atol=1e-5)

    print("KERNEL_OK")
</pallas_src>

<mosaic_0001>
module attributes {stable_mosaic.version = 11 : i64} {
  func.func @_gumbel_softmax_kernel(%arg0: i32, %arg1: memref<16x32xf32, #tpu.memory_space<vmem>>, %arg2: memref<32x8xf32, #tpu.memory_space<vmem>>, %arg3: memref<1x8xf32, #tpu.memory_space<vmem>>, %arg4: memref<16x8xf32, #tpu.memory_space<vmem>>, %arg5: memref<16x8xf32, #tpu.memory_space<vmem>>, %arg6: memref<16x8xf32, #tpu.memory_space<vmem>>, %arg7: memref<16x8xf32, #tpu.memory_space<vmem>>) attributes {dimension_semantics = [#tpu.dimension_semantics<parallel>], iteration_bounds = array<i64: 1>, scalar_prefetch = 0 : i64, scratch_operands = 0 : i64, tpu.core_type = #tpu.core_type<tc>, window_params = [{transform_indices = @transform_0, window_bounds = array<i64: 16, 32>}, {pipeline_mode = #tpu.pipeline_mode<synchronous>, transform_indices = @transform_1, window_bounds = array<i64: 32, 8>}, {pipeline_mode = #tpu.pipeline_mode<synchronous>, transform_indices = @transform_2, window_bounds = array<i64: 1, 8>}, {transform_indices = @transform_3, window_bounds = array<i64: 16, 8>}, {transform_indices = @transform_4, window_bounds = array<i64: 16, 8>}, {transform_indices = @transform_5, window_bounds = array<i64: 16, 8>}, {transform_indices = @transform_6, window_bounds = array<i64: 16, 8>}]} {
    %c0 = arith.constant 0 : index
    %c0_0 = arith.constant 0 : index
    %0 = vector.load %arg1[%c0, %c0_0] : memref<16x32xf32, #tpu.memory_space<vmem>>, vector<16x32xf32>
    %c0_1 = arith.constant 0 : index
    %c0_2 = arith.constant 0 : index
    %1 = vector.load %arg2[%c0_1, %c0_2] : memref<32x8xf32, #tpu.memory_space<vmem>>, vector<32x8xf32>
    %cst = arith.constant dense<0.000000e+00> : vector<16x8xf32>
    %2 = tpu.matmul %0, %1, %cst {dimension_numbers = #tpu.dot_dimension_numbers<[1], [0], [0], [1], [0, 0, 1, 1], [], []>} : vector<16x32xf32>, vector<32x8xf32>, vector<16x8xf32> -> vector<16x8xf32>
    %c0_3 = arith.constant 0 : index
    %c0_4 = arith.constant 0 : index
    %3 = vector.load %arg3[%c0_3, %c0_4] : memref<1x8xf32, #tpu.memory_space<vmem>>, vector<1x8xf32>
    %4 = vector.broadcast %3 : vector<1x8xf32> to vector<16x8xf32>
    %5 = arith.addf %2, %4 : vector<16x8xf32>
    %c0_5 = arith.constant 0 : index
    %c0_6 = arith.constant 0 : index
    %6 = vector.load %arg5[%c0_5, %c0_6] : memref<16x8xf32, #tpu.memory_space<vmem>>, vector<16x8xf32>
    tpu.vector_store %arg5[%c0_5, %c0_6], %5 {strides = array<i32>} : memref<16x8xf32, #tpu.memory_space<vmem>>, vector<16x8xf32>,
    %cst_7 = arith.constant dense<0xFF800000> : vector<16xf32>
    %7 = vector.multi_reduction <maximumf>, %5, %cst_7 [1] : vector<16x8xf32> to vector<16xf32>
    %8 = vector.shape_cast %7 : vector<16xf32> to vector<16x1xf32>
    %9 = vector.broadcast %8 : vector<16x1xf32> to vector<16x8xf32>
    %10 = arith.subf %5, %9 : vector<16x8xf32>
    %11 = math.exp %10 : vector<16x8xf32>
    %cst_8 = arith.constant dense<0.000000e+00> : vector<16xf32>
    %12 = vector.multi_reduction <add>, %11, %cst_8 [1] : vector<16x8xf32> to vector<16xf32>
    %13 = vector.shape_cast %12 : vector<16xf32> to vector<16x1xf32>
    %cst_9 = arith.constant 1.000000e+00 : f32
    %14 = vector.broadcast %cst_9 : f32 to vector<16x1xf32>
    %15 = arith.divf %14, %13 : vector<16x1xf32>
    %16 = vector.broadcast %15 : vector<16x1xf32> to vector<16x8xf32>
    %17 = arith.mulf %11, %16 : vector<16x8xf32>
    %c0_10 = arith.constant 0 : index
    %c0_11 = arith.constant 0 : index
    %18 = vector.load %arg6[%c0_10, %c0_11] : memref<16x8xf32, #tpu.memory_space<vmem>>, vector<16x8xf32>
    tpu.vector_store %arg6[%c0_10, %c0_11], %17 {strides = array<i32>} : memref<16x8xf32, #tpu.memory_space<vmem>>, vector<16x8xf32>,
    %c0_12 = arith.constant 0 : index
    %c0_13 = arith.constant 0 : index
    %19 = vector.load %arg4[%c0_12, %c0_13] : memref<16x8xf32, #tpu.memory_space<vmem>>, vector<16x8xf32>
    %cst_14 = arith.constant 9.99999968E-21 : f32
    %20 = vector.broadcast %cst_14 : f32 to vector<16x8xf32>
    %21 = arith.addf %19, %20 : vector<16x8xf32>
    %22 = math.log %21 : vector<16x8xf32>
    %cst_15 = arith.constant 0.000000e+00 : f32
    %23 = vector.broadcast %cst_15 : f32 to vector<16x8xf32>
    %24 = arith.subf %23, %22 : vector<16x8xf32>
    %cst_16 = arith.constant 9.99999968E-21 : f32
    %25 = vector.broadcast %cst_16 : f32 to vector<16x8xf32>
    %26 = arith.addf %24, %25 : vector<16x8xf32>
    %27 = math.log %26 : vector<16x8xf32>
    %cst_17 = arith.constant 0.000000e+00 : f32
    %28 = vector.broadcast %cst_17 : f32 to vector<16x8xf32>
    %29 = arith.subf %28, %27 : vector<16x8xf32>
    %30 = arith.addf %5, %29 : vector<16x8xf32>
    %cst_18 = arith.constant 1.000000e+00 : f32
    %31 = vector.broadcast %cst_18 : f32 to vector<16x8xf32>
    %32 = arith.mulf %30, %31 : vector<16x8xf32>
    %cst_19 = arith.constant dense<0xFF800000> : vector<16xf32>
    %33 = vector.multi_reduction <maximumf>, %32, %cst_19 [1] : vector<16x8xf32> to vector<16xf32>
    %34 = vector.shape_cast %33 : vector<16xf32> to vector<16x1xf32>
    %35 = vector.broadcast %34 : vector<16x1xf32> to vector<16x8xf32>
    %36 = arith.subf %32, %35 : vector<16x8xf32>
    %37 = math.exp %36 : vector<16x8xf32>
    %cst_20 = arith.constant dense<0.000000e+00> : vector<16xf32>
    %38 = vector.multi_reduction <add>, %37, %cst_20 [1] : vector<16x8xf32> to vector<16xf32>
    %39 = vector.shape_cast %38 : vector<16xf32> to vector<16x1xf32>
    %cst_21 = arith.constant 1.000000e+00 : f32
    %40 = vector.broadcast %cst_21 : f32 to vector<16x1xf32>
    %41 = arith.divf %40, %39 : vector<16x1xf32>
    %42 = vector.broadcast %41 : vector<16x1xf32> to vector<16x8xf32>
    %43 = arith.mulf %37, %42 : vector<16x8xf32>
    %c0_22 = arith.constant 0 : index
    %c0_23 = arith.constant 0 : index
    %44 = vector.load %arg7[%c0_22, %c0_23] : memref<16x8xf32, #tpu.memory_space<vmem>>, vector<16x8xf32>
    tpu.vector_store %arg7[%c0_22, %c0_23], %43 {strides = array<i32>} : memref<16x8xf32, #tpu.memory_space<vmem>>, vector<16x8xf32>,
    return
  }
  func.func @transform_0(%arg0: i32) -> (i32, i32) {
    %c0_i32 = arith.constant 0 : i32
    %c0_i32_0 = arith.constant 0 : i32
    return %arg0, %c0_i32 : i32, i32
  }
  func.func @transform_1(%arg0: i32) -> (i32, i32) {
    %c0_i32 = arith.constant 0 : i32
    %c0_i32_0 = arith.constant 0 : i32
    %c0_i32_1 = arith.constant 0 : i32
    return %c0_i32, %c0_i32_0 : i32, i32
  }
  func.func @transform_2(%arg0: i32) -> (i32, i32) {
    %c0_i32 = arith.constant 0 : i32
    %c0_i32_0 = arith.constant 0 : i32
    %c0_i32_1 = arith.constant 0 : i32
    return %c0_i32, %c0_i32_0 : i32, i32
  }
  func.func @transform_3(%arg0: i32) -> (i32, i32) {
    %c0_i32 = arith.constant 0 : i32
    %c0_i32_0 = arith.constant 0 : i32
    return %arg0, %c0_i32 : i32, i32
  }
  func.func @transform_4(%arg0: i32) -> (i32, i32) {
    %c0_i32 = arith.constant 0 : i32
    %c0_i32_0 = arith.constant 0 : i32
    return %arg0, %c0_i32 : i32, i32
  }
  func.func @transform_5(%arg0: i32) -> (i32, i32) {
    %c0_i32 = arith.constant 0 : i32
    %c0_i32_0 = arith.constant 0 : i32
    return %arg0, %c0_i32 : i32, i32
  }
  func.func @transform_6(%arg0: i32) -> (i32, i32) {
    %c0_i32 = arith.constant 0 : i32
    %c0_i32_0 = arith.constant 0 : i32
    return %arg0, %c0_i32 : i32, i32
  }
}

</mosaic_0001>

<llo_original>
// kernel: tpu_custom_call.1
$region0: #{tpu_custom_call.1}
  #allocation0 [shape = 'u32[]', space=smem, size = 0x4, offset = 0x4, fixed_abs, tag = 'smem constant byte address 0x4 - core index']
  #allocation1 [shape = 'u32[144,128]{1,0:T(1,128)}', space=vmem, size = 0x12000, scoped, tag = 'internal scratch']
  %s0 = inlined_call_operand.vmem [shape: f32[16,32], index: 0, kind: input, shape index: {}]
  %s1 = inlined_call_operand.vmem [shape: f32[32,8], index: 1, kind: input, shape index: {}]
  %s2 = inlined_call_operand.vmem [shape: f32[1,8], index: 2, kind: input, shape index: {}]
  %s3 = inlined_call_operand.vmem [shape: f32[16,8], index: 3, kind: input, shape index: {}]
  %s4 = inlined_call_operand.vmem [shape: f32[16,8], index: 4, kind: output, shape index: {0}]
  %s5 = inlined_call_operand.vmem [shape: f32[16,8], index: 5, kind: output, shape index: {1}]
  %s6 = inlined_call_operand.vmem [shape: f32[16,8], index: 6, kind: output, shape index: {2}]
  %7 = xla_tuple %s4, %s5, %s6
  %s8 = sld [smem:[#allocation0]]
  $region42: #{tpu_custom_call.1} parent=0
    _
  %s10 = ssub.s32 1, %s8
  %s11 = scalar_select 0, %s10, %s8
  // Predicated region
  $region2: #{tpu_custom_call.1} parent=0 // pred_check
    _
  $region3: #{tpu_custom_call.1} parent=0 // pred_check_branch
    %13 = sbr.rel (0) target = $region5
  $region4: #{tpu_custom_call.1} parent=0 // pred_region
    _
  $region5: #{tpu_custom_call.1} parent=0 // pred_fallthru
    _
  // Predicated region
  $region6: #{tpu_custom_call.1} parent=0 // pred_check
    _
  $region7: #{tpu_custom_call.1} parent=0 // pred_check_branch
    %15 = sbr.rel (0) target = $region9
  $region8: #{tpu_custom_call.1} parent=0 // pred_region
    _
  $region9: #{tpu_custom_call.1} parent=0 // pred_fallthru
    _
  // Predicated region
  $region10: #{tpu_custom_call.1} parent=0 // pred_check
    _
  $region11: #{tpu_custom_call.1} parent=0 // pred_check_branch
    %17 = sbr.rel (0) target = $region13
  $region12: #{tpu_custom_call.1} parent=0 // pred_region
    _
  $region13: #{tpu_custom_call.1} parent=0 // pred_fallthru
    _
  // Predicated region
  $region14: #{tpu_custom_call.1} parent=0 // pred_check
    _
  $region15: #{tpu_custom_call.1} parent=0 // pred_check_branch
    %19 = sbr.rel (0) target = $region17
  $region16: #{tpu_custom_call.1} parent=0 // pred_region
    _
  $region17: #{tpu_custom_call.1} parent=0 // pred_fallthru
    _
  %v20 = vld [vmem:[%s0] sm:$0xff]
  %v21 = vld [vmem:[%s0 + $0x8] sm:$0xff]
  %v22 = vld [vmem:[%s1] sm:$0xff]
  %v23 = vld [vmem:[%s1 + $0x8] sm:$0xff]
  %v24 = vld [vmem:[%s1 + $0x10] sm:$0xff]
  %v25 = vld [vmem:[%s1 + $0x18] sm:$0xff]
  %v26 = vld [vmem:[%s2] sm:$0x1]
  %v28 = vlaneseq
  %v29 = vshrl.u32 %v28, 7
  %v30 = vsub.s32 0, %v29
  %v31 = vrot.slane %v26, %v30
  %vm33 = vcmask 261120
  %v35 = vsel %vm33, %v20, 0
  %v38 = vsel %vm33, %v21, 0
  %40 = vmatprep.subr.mxu0 0.0
  %41 = vmatpush1.msra.mxu0 %v22
  %42 = vmatprep.subr.mxu0 0.0
  %43 = vmatpush1.msra.mxu0 %v23
  %44 = vmatprep.subr.mxu0 0.0
  %45 = vmatpush1.msra.mxu0 %v24
  %46 = vmatprep.subr.mxu0 0.0
  %47 = vmatpush1.msra.mxu0 %v25
  %48 = vmatprep.subr.mxu0 0.0
  %49 = vmatpush1.msra.mxu0 0.0
  %50 = vmatprep.subr.mxu0 0.0
  %51 = vmatpush1.msra.mxu0 0.0
  %52 = vmatprep.subr.mxu0 0.0
  %53 = vmatpush1.msra.mxu0 0.0
  %54 = vmatprep.subr.mxu0 0.0
  %55 = vmatpush1.msra.mxu0 0.0
  %56 = vmatprep.subr.mxu0 0.0
  %57 = vmatpush1.msra.mxu0 0.0
  %58 = vmatprep.subr.mxu0 0.0
  %59 = vmatpush1.msra.mxu0 0.0
  %60 = vmatprep.subr.mxu0 0.0
  %61 = vmatpush1.msra.mxu0 0.0
  %62 = vmatprep.subr.mxu0 0.0
  %63 = vmatpush1.msra.mxu0 0.0
  %64 = vmatprep.subr.mxu0 0.0
  %65 = vmatpush1.msra.mxu0 0.0
  %66 = vmatprep.subr.mxu0 0.0
  %67 = vmatpush1.msra.mxu0 0.0
  %68 = vmatprep.subr.mxu0 0.0
  %69 = vmatpush1.msra.mxu0 0.0
  %70 = vmatprep.subr.mxu0 0.0
  %71 = vmatpush1.msra.mxu0 0.0
  %72 = vmatprep.subr.mxu0 0.0
  %73 = vmatpush1.msra.mxu0 0.0
  %74 = vmatprep.subr.mxu0 0.0
  %75 = vmatpush1.msra.mxu0 0.0
  %76 = vmatprep.subr.mxu0 0.0
  %77 = vmatpush1.msra.mxu0 0.0
  %78 = vmatprep.subr.mxu0 0.0
  %79 = vmatpush1.msra.mxu0 0.0
  %80 = vmatprep.subr.mxu0 0.0
  %81 = vmatpush1.msra.mxu0 0.0
  %82 = vmatprep.subr.mxu0 0.0
  %83 = vmatpush1.msra.mxu0 0.0
  %84 = vmatprep.subr.mxu0 0.0
  %85 = vmatpush1.msra.mxu0 0.0
  %86 = vmatprep.subr.mxu0 0.0
  %87 = vmatpush1.msra.mxu0 0.0
  %88 = vmatprep.subr.mxu0 0.0
  %89 = vmatpush1.msra.mxu0 0.0
  %90 = vmatprep.subr.mxu0 0.0
  %91 = vmatpush1.msra.mxu0 0.0
  %92 = vmatprep.subr.mxu0 0.0
  %93 = vmatpush1.msra.mxu0 0.0
  %94 = vmatprep.subr.mxu0 0.0
  %95 = vmatpush1.msra.mxu0 0.0
  %96 = vmatprep.subr.mxu0 0.0
  %97 = vmatpush1.msra.mxu0 0.0
  %98 = vmatprep.subr.mxu0 0.0
  %99 = vmatpush1.msra.mxu0 0.0
  %100 = vmatprep.subr.mxu0 0.0
  %101 = vmatpush1.msra.mxu0 0.0
  %102 = vmatprep.subr.mxu0 0.0
  %103 = vmatpush1.msra.mxu0 0.0
  %104 = vmatprep.mubr.f32.mxu0 0.0
  %105 = vmatmul.mubr.f32.gmra.mrb[0].mxu0 %v35
  %v106 = vpop.f32.mrb[0].mxu0
  %v107 = vadd.f32 %v31, %v106
  %v108 = vpop.f32.mrb[0].mxu0
  %109 = vmatprep.mubr.f32.mxu0 0.0
  %110 = vmatmul.mubr.f32.gmra.mrb[0].mxu0 %v38
  %v111 = vpop.f32.mrb[0].mxu0
  %v112 = vadd.f32 %v31, %v111
  %v113 = vpop.f32.mrb[0].mxu0
  %114 = vdwg.mxu0
  %vm115 = vcmask 64512
  %116 = vst.msk [vmem:[%s4] sm:$0xff] %vm115, %v107
  %117 = vst.msk [vmem:[%s4 + $0x8] sm:$0xff] %vm115, %v112
  %v118 = vsel %vm115, %v107, -inf
  %119 = vmax.xlane.f32.xlu0 %v118
  %v120 = vpop.xlane.xlu0 %119
  %v121 = vsel %vm115, %v112, -inf
  %122 = vmax.xlane.f32.xlu0 %v121
  %v123 = vpop.xlane.xlu0 %122
  %v124 = vsub.f32 %v107, %v120
  %v125 = vsub.f32 %v112, %v123
  %v126 = vmul.f32 %v124, 1.442695
  %v127 = vpow.pop %v126
  %v128 = vmul.f32 %v125, 1.442695
  %v129 = vpow.pop %v128
  %v130 = vsel %vm115, %v127, 0.0
  %131 = vadd.xlane.f32.xlu0 %v130
  %v132 = vpop.xlane.xlu0 %131
  %v133 = vsel %vm115, %v129, 0.0
  %134 = vadd.xlane.f32.xlu0 %v133
  %v135 = vpop.xlane.xlu0 %134
  %v136 = vrcp.pop %v132
  %v137 = vmul.f32 1.0, %v136
  %v138 = vrcp.pop %v135
  %v139 = vmul.f32 1.0, %v138
  %v140 = vmul.f32 %v127, %v137
  %v141 = vmul.f32 %v129, %v139
  %142 = vst.msk [vmem:[%s5] sm:$0xff] %vm115, %v140
  %143 = vst.msk [vmem:[%s5 + $0x8] sm:$0xff] %vm115, %v141
  %v144 = vld [vmem:[%s3] sm:$0xff]
  %v145 = vld [vmem:[%s3 + $0x8] sm:$0xff]
  %v146 = vadd.f32 %v144, 1e-20
  %v147 = vadd.f32 %v145, 1e-20
  %v148 = vlog2.pop %v146
  %v149 = vmul.f32 %v148, 0.6931472
  %v150 = vlog2.pop %v147
  %v151 = vmul.f32 %v150, 0.6931472
  %v152 = vsub.f32 0.0, %v149
  %v153 = vsub.f32 0.0, %v151
  %v154 = vadd.f32 %v152, 1e-20
  %v155 = vadd.f32 %v153, 1e-20
  %v156 = vlog2.pop %v154
  %v157 = vmul.f32 %v156, 0.6931472
  %v158 = vlog2.pop %v155
  %v159 = vmul.f32 %v158, 0.6931472
  %v160 = vsub.f32 0.0, %v157
  %v161 = vsub.f32 0.0, %v159
  %v162 = vadd.f32 %v107, %v160
  %v163 = vadd.f32 %v112, %v161
  %v164 = vsel %vm115, %v162, -inf
  %165 = vmax.xlane.f32.xlu0 %v164
  %v166 = vpop.xlane.xlu0 %165
  %v167 = vsel %vm115, %v163, -inf
  %168 = vmax.xlane.f32.xlu0 %v167
  %v169 = vpop.xlane.xlu0 %168
  %v170 = vsub.f32 %v162, %v166
  %v171 = vsub.f32 %v163, %v169
  %v172 = vmul.f32 %v170, 1.442695
  %v173 = vpow.pop %v172
  %v174 = vmul.f32 %v171, 1.442695
  %v175 = vpow.pop %v174
  %v176 = vsel %vm115, %v173, 0.0
  %177 = vadd.xlane.f32.xlu0 %v176
  %v178 = vpop.xlane.xlu0 %177
  %v179 = vsel %vm115, %v175, 0.0
  %180 = vadd.xlane.f32.xlu0 %v179
  %v181 = vpop.xlane.xlu0 %180
  %v182 = vrcp.pop %v178
  %v183 = vmul.f32 1.0, %v182
  %v184 = vrcp.pop %v181
  %v185 = vmul.f32 1.0, %v184
  %v186 = vmul.f32 %v173, %v183
  %v187 = vmul.f32 %v175, %v185
  %188 = vst.msk [vmem:[%s6] sm:$0xff] %vm115, %v186
  %189 = vst.msk [vmem:[%s6 + $0x8] sm:$0xff] %vm115, %v187
  // Predicated region
  $region18: #{tpu_custom_call.1} parent=0 // pred_check
    _
  $region19: #{tpu_custom_call.1} parent=0 // pred_check_branch
    %191 = sbr.rel (0) target = $region21
  $region20: #{tpu_custom_call.1} parent=0 // pred_region
    _
  $region21: #{tpu_custom_call.1} parent=0 // pred_fallthru
    _
  // Predicated region
  $region22: #{tpu_custom_call.1} parent=0 // pred_check
    _
  $region23: #{tpu_custom_call.1} parent=0 // pred_check_branch
    %193 = sbr.rel (0) target = $region25
  $region24: #{tpu_custom_call.1} parent=0 // pred_region
    _
  $region25: #{tpu_custom_call.1} parent=0 // pred_fallthru
    _
  // Predicated region
  $region26: #{tpu_custom_call.1} parent=0 // pred_check
    _
  $region27: #{tpu_custom_call.1} parent=0 // pred_check_branch
    %195 = sbr.rel (0) target = $region29
  $region28: #{tpu_custom_call.1} parent=0 // pred_region
    _
  $region29: #{tpu_custom_call.1} parent=0 // pred_fallthru
    _
  // Predicated region
  $region30: #{tpu_custom_call.1} parent=0 // pred_check
    _
  $region31: #{tpu_custom_call.1} parent=0 // pred_check_branch
    %197 = sbr.rel (0) target = $region33
  $region32: #{tpu_custom_call.1} parent=0 // pred_region
    _
  $region33: #{tpu_custom_call.1} parent=0 // pred_fallthru
    _
  // Predicated region
  $region34: #{tpu_custom_call.1} parent=0 // pred_check
    _
  $region35: #{tpu_custom_call.1} parent=0 // pred_check_branch
    %199 = sbr.rel (0) target = $region37
  $region36: #{tpu_custom_call.1} parent=0 // pred_region
    _
  $region37: #{tpu_custom_call.1} parent=0 // pred_fallthru
    _
  // Predicated region
  $region38: #{tpu_custom_call.1} parent=0 // pred_check
    _
  $region39: #{tpu_custom_call.1} parent=0 // pred_check_branch
    %201 = sbr.rel (0) target = $region41
  $region40: #{tpu_custom_call.1} parent=0 // pred_region
    _
  $region41: #{tpu_custom_call.1} parent=0 // pred_fallthru
    _

</llo_original>
